<compile_context>
chip_gen: v7x
topology: tpu7x:2x2x1
jax: 0.10.0
libtpu: 0.0.40
codegen_flags: <defaults>
</compile_context>

<pallas_src>
import functools

import jax
import jax.numpy as jnp
from jax.experimental import pallas as pl
from jax.experimental.pallas import tpu as pltpu


def _round_up(x, m):
    return (x + m - 1) // m * m


def _choose_m_tile(M, target=2048):
    """Row-tile size: multiple of 16 (bf16 sublane packing), >=2 tiles when
    M is small so both v7x TensorCores get work, capped at `target`."""
    if M <= target:
        mt = _round_up(pl.cdiv(M, 2), 16)
        return min(mt, _round_up(M, 16))
    return _round_up(target, 16)


# ----------------------------------------------------------------------------
# Pallas kernel: one lane-dense GEMM over all (layer, head) chunks at once.
# ----------------------------------------------------------------------------
def _headwise_gemm_kernel(x_ref, w_ref, b_ref, o_ref):
    # x_ref: (m_tile, H_pad)    bf16  -- rows are (layer, batch, token) positions
    # w_ref: (H_pad, N_pad)     bf16  -- block-diagonal shared classifier weight
    # b_ref: (1, N_pad)         f32   -- per-head-tiled bias (zero padded)
    # o_ref: (m_tile, N_pad)    bf16  -- f32 accumulate, cast on store
    acc = jnp.dot(x_ref[...], w_ref[...], preferred_element_type=jnp.float32)
    o_ref[...] = (acc + b_ref[...]).astype(o_ref.dtype)


def headwise_classifier(x, w_bd, b_bd, *, m_tile=2048, out_dtype=jnp.bfloat16):
    """x: [M, H_pad] bf16, w_bd: [H_pad, N_pad] bf16, b_bd: [1, N_pad] f32
    -> [M, N_pad] out_dtype.

    No wrapper-side padding of M: grid = cdiv(M, m_tile); Pallas masks the
    ragged last block (OOB input rows are unspecified but their output rows
    are never written).
    At BERT scale (H=768), a 2048-row bf16 input tile is ~3 MiB and the bf16
    output tile ~0.5 MiB; double-buffered this stays well under v5e's 16 MiB
    default scoped VMEM and v7x's 64 MiB per-core physical VMEM. Raise
    vmem_limit_bytes only if m_tile grows past ~2048.
    """
    M, H = x.shape
    N_pad = w_bd.shape[1]
    mt = _choose_m_tile(M, m_tile)

    return pl.pallas_call(
        _headwise_gemm_kernel,
        out_shape=jax.ShapeDtypeStruct((M, N_pad), out_dtype),
        grid=(pl.cdiv(M, mt),),
        in_specs=[
            pl.BlockSpec((mt, H), lambda i: (i, 0)),
            pl.BlockSpec((H, N_pad), lambda i: (0, 0)),   # VMEM-resident weight
            pl.BlockSpec((1, N_pad), lambda i: (0, 0)),   # VMEM-resident bias
        ],
        out_specs=pl.BlockSpec((mt, N_pad), lambda i: (i, 0)),
        compiler_params=pltpu.CompilerParams(
            dimension_semantics=("parallel",),  # shards M tiles across TCs on v7x
        ),
    )(x, w_bd, b_bd)


# ----------------------------------------------------------------------------
# Synthetic backbone (plain JAX glue): produces (num_layers + 1) hidden states
# of shape [B, T, H], mimicking `output_hidden_states=True`. The collected
# hidden states are emitted in `out_dtype` (cast fused into the epilogue);
# the layer-to-layer chain stays f32.
# ----------------------------------------------------------------------------
def synthetic_backbone(input_ids, attention_mask, emb_table, layer_ws, layer_bs,
                       out_dtype=jnp.float32):
    mask = attention_mask.astype(jnp.float32)[..., None]   # [B, T, 1]
    h = emb_table[input_ids] * mask                          # [B, T, H]
    hidden_states = [h.astype(out_dtype)]
    for W, bvec in zip(layer_ws, layer_bs):
        h = jnp.tanh(jnp.einsum("bth,hk->btk", h, W) + bvec) * mask
        hidden_states.append(h.astype(out_dtype))
    return hidden_states                                     # list of [B, T, H]


# ----------------------------------------------------------------------------
# Forward pass (hot path = single Pallas GEMM, no padded-M copy, bf16 slab).
# ----------------------------------------------------------------------------
@functools.partial(jax.jit, static_argnames=("num_heads",))
def headwise_forward(input_ids, attention_mask, params, num_heads):
    """Returns logits stacked as [L, B, T, NH, C] (no post-kernel transpose).

    out[l, :, :, h, :] equals heads_logits[l * num_heads + h] of the PyTorch
    module (layer-major / head-minor ordering); use headwise_logits_list for
    the explicit list form.
    """
    hidden_states = synthetic_backbone(
        input_ids, attention_mask,
        params["emb_table"], params["layer_ws"], params["layer_bs"],
        out_dtype=jnp.bfloat16,
    )
    L = len(hidden_states)
    B, T, H = hidden_states[0].shape
    C = params["clf_w"].shape[1]

    # Natural layout, bf16 slab written once (no f32 stack + convert pass).
    x = jnp.stack(hidden_states, axis=0).reshape(L * B * T, H)

    # Shared classifier folded into a block-diagonal weight: head h's logits
    # land in output columns [h*C, (h+1)*C). N padded to the MINIMUM multiple
    # of 128 (lane-dense stores; do not widen further — kernel is HBM-bound).
    n_cols = num_heads * C
    n_pad = _round_up(max(n_cols, 128), 128)
    w_bd = jnp.kron(jnp.eye(num_heads, dtype=jnp.float32), params["clf_w"])
    w_bd = jnp.pad(w_bd, ((0, 0), (0, n_pad - n_cols)))
    b_bd = jnp.pad(jnp.tile(params["clf_b"].astype(jnp.float32), num_heads),
                   (0, n_pad - n_cols)).reshape(1, n_pad)

    # Lane-dense contraction dim: real backbones (H=768/1024) are already
    # multiples of 128 and skip this; the toy H=32 pads once (zero weight
    # rows keep the result exact).
    h_pad = _round_up(H, 128)
    if h_pad != H:
        x = jnp.pad(x, ((0, 0), (0, h_pad - H)))
        w_bd = jnp.pad(w_bd, ((0, h_pad - H), (0, 0)))
    w_bd = w_bd.astype(jnp.bfloat16)

    out = headwise_classifier(x, w_bd, b_bd)                # [L*B*T, n_pad] bf16
    out = out[:, :n_cols].reshape(L, B, T, num_heads, C)    # bf16, no transpose
    return out


def headwise_logits_list(stacked):
    """PyTorch-parity helper: [L, B, T, NH, C] -> layer-major/head-minor list."""
    L, _, _, NH, _ = stacked.shape
    return [stacked[l, :, :, h, :] for l in range(L) for h in range(NH)]


# ----------------------------------------------------------------------------
# Pure-JAX (f32) reference for correctness checking.
# ----------------------------------------------------------------------------
def headwise_forward_ref(input_ids, attention_mask, params, num_heads):
    hidden_states = synthetic_backbone(
        input_ids, attention_mask,
        params["emb_table"], params["layer_ws"], params["layer_bs"],
        out_dtype=jnp.float32,
    )
    H = hidden_states[0].shape[-1]
    HD = H // num_heads
    heads_logits = []
    for layer in hidden_states:
        for h in range(num_heads):
            chunk = layer[:, :, h * HD:(h + 1) * HD]
            heads_logits.append(chunk @ params["clf_w"] + params["clf_b"])
    return heads_logits


# ----------------------------------------------------------------------------
# Main
# ----------------------------------------------------------------------------
if __name__ == "__main__":
    # Config (mimics args): embed_size='xsmall' -> H=32, num_labels=3,
    # max_length=8, batch_size=2, 2-layer synthetic backbone, 4 heads.
    B, T, H = 2, 8, 32
    NUM_HEADS = 4
    NUM_LAYERS = 2
    NUM_LABELS = 3
    VOCAB = 30

    key = jax.random.PRNGKey(0)
    k_emb, k_lw, k_lb, k_cw, k_cb, k_ids = jax.random.split(key, 6)

    params = {
        "emb_table": jax.random.normal(k_emb, (VOCAB, H), jnp.float32) * 0.1,
        "layer_ws": jax.random.normal(k_lw, (NUM_LAYERS, H, H), jnp.float32) * 0.1,
        "layer_bs": jax.random.normal(k_lb, (NUM_LAYERS, H), jnp.float32) * 0.01,
        "clf_w": jax.random.normal(k_cw, (H // NUM_HEADS, NUM_LABELS), jnp.float32) * 0.1,
        "clf_b": jax.random.normal(k_cb, (NUM_LABELS,), jnp.float32) * 0.01,
    }

    input_ids = jax.random.randint(k_ids, (B, T), 0, VOCAB)
    attention_mask = jnp.ones((B, T), dtype=jnp.int32).at[:, T - 2:].set(0)

    out = headwise_forward(input_ids, attention_mask, params, NUM_HEADS)
    out = jax.block_until_ready(out)

    L = NUM_LAYERS + 1
    assert out.shape == (L, B, T, NUM_HEADS, NUM_LABELS), out.shape

    logits_list = headwise_logits_list(out)
    ref_logits = headwise_forward_ref(input_ids, attention_mask, params, NUM_HEADS)
    assert len(logits_list) == len(ref_logits) == L * NUM_HEADS

    # bf16 hidden states / weights / logits vs f32 reference -> modest tolerance.
    for l in range(L):
        for h in range(NUM_HEADS):
            got = logits_list[l * NUM_HEADS + h].astype(jnp.float32)
            want = ref_logits[l * NUM_HEADS + h]
            assert got.shape == (B, T, NUM_LABELS)
            assert jnp.allclose(got, want, atol=2e-2, rtol=2e-2), (l, h)

    print("KERNEL_OK")
</pallas_src>

<mosaic_0001>
module attributes {stable_mosaic.version = 11 : i64} {
  func.func @_headwise_gemm_kernel(%arg0: i32, %arg1: memref<32x128xbf16, #tpu.memory_space<vmem>>, %arg2: memref<128x128xbf16, #tpu.memory_space<vmem>>, %arg3: memref<1x128xf32, #tpu.memory_space<vmem>>, %arg4: memref<32x128xbf16, #tpu.memory_space<vmem>>) attributes {dimension_semantics = [#tpu.dimension_semantics<parallel>], iteration_bounds = array<i64: 2>, scalar_prefetch = 0 : i64, scratch_operands = 0 : i64, tpu.core_type = #tpu.core_type<tc>, window_params = [{transform_indices = @transform_0, window_bounds = array<i64: 32, 128>}, {pipeline_mode = #tpu.pipeline_mode<synchronous>, transform_indices = @transform_1, window_bounds = array<i64: 128, 128>}, {pipeline_mode = #tpu.pipeline_mode<synchronous>, transform_indices = @transform_2, window_bounds = array<i64: 1, 128>}, {transform_indices = @transform_3, window_bounds = array<i64: 32, 128>}]} {
    %c0 = arith.constant 0 : index
    %c0_0 = arith.constant 0 : index
    %0 = vector.load %arg1[%c0, %c0_0] : memref<32x128xbf16, #tpu.memory_space<vmem>>, vector<32x128xbf16>
    %c0_1 = arith.constant 0 : index
    %c0_2 = arith.constant 0 : index
    %1 = vector.load %arg2[%c0_1, %c0_2] : memref<128x128xbf16, #tpu.memory_space<vmem>>, vector<128x128xbf16>
    %cst = arith.constant dense<0.000000e+00> : vector<32x128xf32>
    %2 = tpu.matmul %0, %1, %cst {dimension_numbers = #tpu.dot_dimension_numbers<[1], [0], [0], [1], [0, 0, 1, 1], [], []>} : vector<32x128xbf16>, vector<128x128xbf16>, vector<32x128xf32> -> vector<32x128xf32>
    %c0_3 = arith.constant 0 : index
    %c0_4 = arith.constant 0 : index
    %3 = vector.load %arg3[%c0_3, %c0_4] : memref<1x128xf32, #tpu.memory_space<vmem>>, vector<1x128xf32>
    %4 = vector.broadcast %3 : vector<1x128xf32> to vector<32x128xf32>
    %5 = arith.addf %2, %4 : vector<32x128xf32>
    %6 = arith.truncf %5 : vector<32x128xf32> to vector<32x128xbf16>
    %c0_5 = arith.constant 0 : index
    %c0_6 = arith.constant 0 : index
    %7 = vector.load %arg4[%c0_5, %c0_6] : memref<32x128xbf16, #tpu.memory_space<vmem>>, vector<32x128xbf16>
    tpu.vector_store %arg4[%c0_5, %c0_6], %6 {strides = array<i32>} : memref<32x128xbf16, #tpu.memory_space<vmem>>, vector<32x128xbf16>,
    return
  }
  func.func @transform_0(%arg0: i32) -> (i32, i32) {
    %c0_i32 = arith.constant 0 : i32
    %c0_i32_0 = arith.constant 0 : i32
    return %arg0, %c0_i32 : i32, i32
  }
  func.func @transform_1(%arg0: i32) -> (i32, i32) {
    %c0_i32 = arith.constant 0 : i32
    %c0_i32_0 = arith.constant 0 : i32
    %c0_i32_1 = arith.constant 0 : i32
    return %c0_i32, %c0_i32_0 : i32, i32
  }
  func.func @transform_2(%arg0: i32) -> (i32, i32) {
    %c0_i32 = arith.constant 0 : i32
    %c0_i32_0 = arith.constant 0 : i32
    %c0_i32_1 = arith.constant 0 : i32
    return %c0_i32, %c0_i32_0 : i32, i32
  }
  func.func @transform_3(%arg0: i32) -> (i32, i32) {
    %c0_i32 = arith.constant 0 : i32
    %c0_i32_0 = arith.constant 0 : i32
    return %arg0, %c0_i32 : i32, i32
  }
}

</mosaic_0001>

<llo_original>
// kernel: tile.9
$region0: #{tile.9}
  %s0 = inlined_call_operand.vmem [shape: f32[4,3], index: 0, kind: input, shape index: {}]
  %s1 = inlined_call_operand.vmem [shape: f32[12], index: 1, kind: output, shape index: {}]
  $region1: #{tile.9} parent=0
    #allocation0 [shape = 'u8[4096]{0}', space=vmem, size = 0x1000, scoped, tag = 'scoped mem for output reshape']
    #allocation1 [shape = 'u8[4096]{0}', space=vmem, size = 0x1000, scoped, tag = 'scoped mem for input reshape']
    %s3 = sshllo.u32 0, 4
    %v4 = vld [vmem:[%s0] sm:%s3]
    %5 = vst [vmem:[#allocation1] sm:%s3] %v4
    %v6 = vld [vmem:[#allocation1] sm:$0x1]
    %vm7 = vcmask 23552
    %8 = vst.msk [vmem:[#allocation0] sm:$0x1] %vm7, %v6
    %s9 = scalar_lea.vmem [#allocation1], 3
    %v10 = vld [vmem:[%s9] sm:$0x1]
    %11 = vrot.lane.b32.xlu0 %v10, 9
    %v12 = vpop.permute.xlu0 %11
    %vm13 = vcmask 97352
    %14 = vst.msk [vmem:[#allocation0] sm:$0x1] %vm13, %v12
    %s15 = scalar_lea.vmem [#allocation1], 2
    %v16 = vld [vmem:[%s15] sm:$0x1]
    %17 = vrot.lane.b32.xlu0 %v16, 6
    %v18 = vpop.permute.xlu0 %17
    %vm19 = vcmask 72752
    %20 = vst.msk [vmem:[#allocation0] sm:$0x1] %vm19, %v18
    %s21 = scalar_lea.vmem [#allocation1], 1
    %v22 = vld [vmem:[%s21] sm:$0x1]
    %23 = vrot.lane.b32.xlu0 %v22, 3
    %v24 = vpop.permute.xlu0 %23
    %vm25 = vcmask 48152
    %26 = vst.msk [vmem:[#allocation0] sm:$0x1] %vm25, %v24
    %s28 = sshllo.u32 0, 1
    %v30 = vld [vmem:[#allocation0] sm:%s28]
    %s31 = sshllo.u32 0, 1
    %32 = vst [vmem:[%s1] sm:%s31] %v30

// kernel: tile.8
$region0: #{tile.8}
  #allocation0 [shape = 's32[1]{0}', space=sflag, size = 0x4, scoped, tag = 'scoped memory for tile.8']
  %s0 = inlined_call_operand.vmem [shape: f32[3], index: 0, kind: input, shape index: {}]
  %s1 = inlined_call_operand.vmem [shape: f32[4,3], index: 1, kind: output, shape index: {}]
  // Predicated region
  $region2: #{tile.8} parent=0 // pred_check
    _
  $region3: #{tile.8} parent=0 // pred_check_branch
    %3 = sbr.rel (0) target = $region5
  $region4: #{tile.8} parent=0 // pred_region
    _
  $region5: #{tile.8} parent=0 // pred_fallthru
    _
  %v4 = vld [vmem:[%s0] ss:$0 sm:$0xff]
  %5 = vst [vmem:[%s1] sm:$0xf] %v4

// kernel: headwise_forward.1
$region0: #{headwise_forward.1}
  #allocation0 [shape = 'u32[]', space=smem, size = 0x4, offset = 0x4, fixed_abs, tag = 'smem constant byte address 0x4 - core index']
  #allocation1 [shape = 'u32[144,128]{1,0:T(1,128)}', space=vmem, size = 0x12000, scoped, tag = 'internal scratch']
  %s0 = inlined_call_operand.vmem [shape: bf16[48,128], index: 0, kind: input, shape index: {}]
  %s1 = inlined_call_operand.vmem [shape: bf16[128,128], index: 1, kind: input, shape index: {}]
  %s2 = inlined_call_operand.vmem [shape: f32[1,128], index: 2, kind: input, shape index: {}]
  %s3 = inlined_call_operand.vmem [shape: bf16[48,128], index: 3, kind: output, shape index: {}]
  %s4 = sld [smem:[#allocation0]]
  $region89: #{headwise_forward.1} parent=0
    _
  %s6 = ssub.s32 1, %s4
  %s7 = scalar_select 0, %s6, %s4
  $region1: #{headwise_forward.1} parent=0
    #allocation2 [shape = 'u8[16384]{0}', space=vmem, size = 0x4000, scoped, tag = 'output window, operand 0']
    loop: start=0, step=1, limit=4
    $region2: #{headwise_forward.1} parent=1 // loop_pre_header
      _
    $region3: #{headwise_forward.1} parent=1 // loop_header
      %s9 = sphi 0, %s13
      %p10 = scmp.ge.s32.totalorder %s9, 4
      %s19 = sphi 0, %s21
      %s22 = sphi 0, %s19
      %s23 = sphi 0, %s22
      %s39 = sphi 0, %s23
      %s43 = sphi 0, %s43
      %s45 = sphi 0, %s43
      %s46 = sphi 0, %s45
      %s60 = sphi 0, %s46
      %s64 = sphi 0, %s64
      %s66 = sphi 0, %s64
      %s67 = sphi 0, %s66
      %s81 = sphi 0, %s67
      %s87 = sphi 0, %s89
      %s90 = sphi 0, %s87
      %s91 = sphi 0, %s90
      %s107 = sphi 0, %s91
    $region4: #{headwise_forward.1} parent=1 // loop_header_branch
      %12 = sbr.rel (%p10) target = $region8
    $region5: #{headwise_forward.1} parent=1 // loop_body
      %s14 = ssub.s32 %s9, 1
      %s15 = ssub.s32 %s9, 2
      %s16 = sadd.s32 %s9, 1
      %s17 = ssub.s32 %s9, %s16
      %p18 = scmp.eq.s32.totalorder %s17, 0
      %s20 = sadd.s32 %s19, 1
      %s21 = scalar_select %p18, %s19, %s20
      %p24 = pneg %p18
      %p25 = scmp.eq.s32.totalorder %s9, 1
      %p26 = por %p24, %p25
      %p27 = scmp.ne.s32.totalorder %s19, %s22
      %p28 = scmp.eq.s32.totalorder %s9, 0
      %p29 = por %p27, %p28
      %p30 = scmp.ne.s32.totalorder %s19, %s22
      %p31 = scmp.eq.s32.totalorder %s14, 1
      %p32 = por %p30, %p31
      %p33 = scmp.ne.s32.totalorder %s22, %s23
      %p34 = scmp.eq.s32.totalorder %s14, 0
      %p35 = por %p33, %p34
      %p36 = scmp.ne.s32.totalorder %s22, %s23
      %p37 = scmp.eq.s32.totalorder %s15, 1
      %p38 = por %p36, %p37
      %p40 = scmp.ne.s32.totalorder %s23, %s39
      %p41 = scmp.eq.s32.totalorder %s15, 0
      %p42 = por %p40, %p41
      %s44 = sadd.s32 %s43, 1
      %p47 = scmp.eq.s32.totalorder %s9, 1
      %p48 = scmp.ne.s32.totalorder %s43, %s45
      %p49 = scmp.eq.s32.totalorder %s9, 0
      %p50 = por %p48, %p49
      %p51 = scmp.ne.s32.totalorder %s43, %s45
      %p52 = scmp.eq.s32.totalorder %s14, 1
      %p53 = por %p51, %p52
      %p54 = scmp.ne.s32.totalorder %s45, %s46
      %p55 = scmp.eq.s32.totalorder %s14, 0
      %p56 = por %p54, %p55
      %p57 = scmp.ne.s32.totalorder %s45, %s46
      %p58 = scmp.eq.s32.totalorder %s15, 1
      %p59 = por %p57, %p58
      %p61 = scmp.ne.s32.totalorder %s46, %s60
      %p62 = scmp.eq.s32.totalorder %s15, 0
      %p63 = por %p61, %p62
      %s65 = sadd.s32 %s64, 1
      %p68 = scmp.eq.s32.totalorder %s9, 1
      %p69 = scmp.ne.s32.totalorder %s64, %s66
      %p70 = scmp.eq.s32.totalorder %s9, 0
      %p71 = por %p69, %p70
      %p72 = scmp.ne.s32.totalorder %s64, %s66
      %p73 = scmp.eq.s32.totalorder %s14, 1
      %p74 = por %p72, %p73
      %p75 = scmp.ne.s32.totalorder %s66, %s67
      %p76 = scmp.eq.s32.totalorder %s14, 0
      %p77 = por %p75, %p76
      %p78 = scmp.ne.s32.totalorder %s66, %s67
      %p79 = scmp.eq.s32.totalorder %s15, 1
      %p80 = por %p78, %p79
      %p82 = scmp.ne.s32.totalorder %s67, %s81
      %p83 = scmp.eq.s32.totalorder %s15, 0
      %p84 = por %p82, %p83
      %s85 = ssub.s32 %s9, %s16
      %p86 = scmp.eq.s32.totalorder %s85, 0
      %s88 = sadd.s32 %s87, 1
      %s89 = scalar_select %p86, %s87, %s88
      %p92 = pneg %p86
      %p93 = scmp.eq.s32.totalorder %s9, 1
      %p94 = por %p92, %p93
      %p95 = scmp.ne.s32.totalorder %s87, %s90
      %p96 = scmp.eq.s32.totalorder %s9, 0
      %p97 = por %p95, %p96
      %p98 = scmp.ne.s32.totalorder %s87, %s90
      %p99 = scmp.eq.s32.totalorder %s14, 1
      %p100 = por %p98, %p99
      %p101 = scmp.ne.s32.totalorder %s90, %s91
      %p102 = scmp.eq.s32.totalorder %s14, 0
      %p103 = por %p101, %p102
      %p104 = scmp.ne.s32.totalorder %s90, %s91
      %p105 = scmp.eq.s32.totalorder %s15, 1
      %p106 = por %p104, %p105
      %p108 = scmp.ne.s32.totalorder %s91, %s107
      %p109 = scmp.eq.s32.totalorder %s15, 0
      %p110 = por %p108, %p109
      %p111 = scmp.le.s32.totalorder 1, %s9
      %p112 = scmp.lt.s32.totalorder %s9, 3
      %p113 = pnand %p111, %p112
      %p114 = pneg %p113
      // Predicated region
      $region9: #{headwise_forward.1} parent=5 // pred_check
        _
      $region10: #{headwise_forward.1} parent=5 // pred_check_branch
        %116 = sbr.rel (%p113) target = $region12
      $region11: #{headwise_forward.1} parent=5 // pred_region
        %s117 = ssub.s32 %s9, 1
        // Predicated region
        $region13: #{headwise_forward.1} parent=11 // pred_check
          %p118 = pneg %p56
        $region14: #{headwise_forward.1} parent=11 // pred_check_branch
          %120 = sbr.rel (%p118) target = $region16
        $region15: #{headwise_forward.1} parent=11 // pred_region
          _
        $region16: #{headwise_forward.1} parent=11 // pred_fallthru
          _
        // Predicated region
        $region17: #{headwise_forward.1} parent=11 // pred_check
          %p121 = pneg %p77
        $region18: #{headwise_forward.1} parent=11 // pred_check_branch
          %123 = sbr.rel (%p121) target = $region20
        $region19: #{headwise_forward.1} parent=11 // pred_region
          _
        $region20: #{headwise_forward.1} parent=11 // pred_fallthru
          _
      $region12: #{headwise_forward.1} parent=5 // pred_fallthru
        _
      %p124 = scmp.lt.s32.totalorder %s9, 2
      // Predicated region
      $region21: #{headwise_forward.1} parent=5 // pred_check
        %p125 = pneg %p124
      $region22: #{headwise_forward.1} parent=5 // pred_check_branch
        %127 = sbr.rel (%p125) target = $region24
      $region23: #{headwise_forward.1} parent=5 // pred_region
        // Predicated region
        $region25: #{headwise_forward.1} parent=23 // pred_check
          %p128 = pneg %p29
        $region26: #{headwise_forward.1} parent=23 // pred_check_branch
          %130 = sbr.rel (%p128) target = $region28
        $region27: #{headwise_forward.1} parent=23 // pred_region
          %s131 = smul.u32 4, %s9
          %s132 = ssub.s32 6, %s131
          %p133 = scmp.lt.s32.totalorder %s132, 4
          %s134 = scalar_select %p133, %s132, 4
          %s135 = smul.u32 64, %s134
          %p136 = scmp.lt.s32.totalorder %s131, 5
          %s137 = scalar_select %p136, %s131, 5
          %s138 = smul.addr %s137, 4
          %s139 = scalar_lea.vmem %s0, %s138
          %s140 = smul.u32 4, %s9
          %s141 = ssub.s32 6, %s140
          %p142 = scmp.lt.s32.totalorder %s141, 4
          %s143 = scalar_select %p142, %s141, 4
          %s144 = smul.u32 64, %s143
        $region28: #{headwise_forward.1} parent=23 // pred_fallthru
          _
      $region24: #{headwise_forward.1} parent=5 // pred_fallthru
        _
      %p145 = scmp.le.s32.totalorder 1, %s9
      %p146 = scmp.lt.s32.totalorder %s9, 3
      %p147 = pnand %p145, %p146
      %p148 = pneg %p147
      // Predicated region
      $region29: #{headwise_forward.1} parent=5 // pred_check
        _
      $region30: #{headwise_forward.1} parent=5 // pred_check_branch
        %150 = sbr.rel (%p147) target = $region32
      $region31: #{headwise_forward.1} parent=5 // pred_region
        %s151 = ssub.s32 %s9, 1
        %s152 = smul.u32 4, %s14
        %s153 = ssub.s32 6, %s152
        %p154 = scmp.lt.s32.totalorder %s153, 4
        %s155 = scalar_select %p154, %s153, 4
        %s156 = smul.u32 64, %s155
        %p157 = scmp.lt.s32.totalorder %s152, 5
        %s158 = scalar_select %p157, %s152, 5
        %s159 = smul.addr %s158, 4
        %s160 = scalar_lea.vmem %s0, %s159
        %p161 = pneg %p35
        %p162 = pneg %p32
        %p163 = pneg %p56
        %p164 = pneg %p53
        %p165 = pneg %p77
        %p166 = pneg %p74
        %p167 = pneg %p103
        %p168 = pneg %p100
        %s169 = sand.u32 %s90, 1
        %s170 = sand.u32 %s90, 1
        %s171 = smul.addr %s170, 16
        %s172 = scalar_lea.vmem [#allocation2], %s171
        %s173 = smul.u32 4, %s14
        %s174 = ssub.s32 6, %s173
        %p175 = scmp.lt.s32.totalorder %s174, 4
        %s176 = scalar_select %p175, %s174, 4
        %s177 = smul.u32 64, %s176
        %p178 = scmp.lt.s32.totalorder %s173, 5
        %s179 = scalar_select %p178, %s173, 5
        %s180 = smul.addr %s179, 4
        %s181 = scalar_lea.vmem %s0, %s180
        %s182 = smul.u32 4, %s14
        %s183 = ssub.s32 6, %s182
        %p184 = scmp.lt.s32.totalorder %s183, 4
        %s185 = scalar_select %p184, %s183, 4
        %s186 = smul.u32 64, %s185
        %s187 = smul.u32 4, %s14
        %s188 = ssub.s32 6, %s187
        %p189 = scmp.lt.s32.totalorder %s188, 4
        %s190 = scalar_select %p189, %s188, 4
        %s191 = smul.u32 64, %s190
        %v193 = vld [vmem:[%s181] sm:$0xf]
        %v194 = vld [vmem:[%s181 + $0x4] sm:$0xf]
        %v195 = vld [vmem:[%s181 + $0x8] sm:$0xf]
        %v196 = vld [vmem:[%s181 + $0xc] sm:$0xf]
        %v197 = vld [vmem:[%s1] sm:$0xf]
        %v198 = vld [vmem:[%s1 + $0x4] sm:$0xf]
        %v199 = vld [vmem:[%s1 + $0x8] sm:$0xf]
        %v200 = vld [vmem:[%s1 + $0xc] sm:$0xf]
        %v201 = vld [vmem:[%s1 + $0x10] sm:$0xf]
        %v202 = vld [vmem:[%s1 + $0x14] sm:$0xf]
        %v203 = vld [vmem:[%s1 + $0x18] sm:$0xf]
        %v204 = vld [vmem:[%s1 + $0x1c] sm:$0xf]
        %v205 = vld [vmem:[%s1 + $0x20] sm:$0xf]
        %v206 = vld [vmem:[%s1 + $0x24] sm:$0xf]
        %v207 = vld [vmem:[%s1 + $0x28] sm:$0xf]
        %v208 = vld [vmem:[%s1 + $0x2c] sm:$0xf]
        %v209 = vld [vmem:[%s1 + $0x30] sm:$0xf]
        %v210 = vld [vmem:[%s1 + $0x34] sm:$0xf]
        %v211 = vld [vmem:[%s1 + $0x38] sm:$0xf]
        %v212 = vld [vmem:[%s1 + $0x3c] sm:$0xf]
        %v213 = vld [vmem:[%s2] sm:$0x1]
        %v215 = vlaneseq
        %v216 = vshrl.u32 %v215, 7
        %v217 = vsub.s32 0, %v216
        %v218 = vrot.slane %v213, %v217
        %v224 = vunpack.c.l.b16 %v193
        %v225 = vunpack.c.l.b16 %v194
        %v226 = vunpack.c.l.b16 %v195
        %v227 = vunpack.c.l.b16 %v196
        %v228 = vpack.c.b16 %v225, %v224
        %v229 = vpack.c.b16 %v227, %v226
        %v248 = vunpack.c.l.b16 %v197
        %v249 = vunpack.c.l.b16 %v198
        %v250 = vunpack.c.l.b16 %v199
        %v251 = vunpack.c.l.b16 %v200
        %v252 = vunpack.c.l.b16 %v201
        %v253 = vunpack.c.l.b16 %v202
        %v254 = vunpack.c.l.b16 %v203
        %v255 = vunpack.c.l.b16 %v204
        %v256 = vunpack.c.l.b16 %v205
        %v257 = vunpack.c.l.b16 %v206
        %v258 = vunpack.c.l.b16 %v207
        %v259 = vunpack.c.l.b16 %v208
        %v260 = vunpack.c.l.b16 %v209
        %v261 = vunpack.c.l.b16 %v210
        %v262 = vunpack.c.l.b16 %v211
        %v263 = vunpack.c.l.b16 %v212
        %v264 = vpack.c.b16 %v249, %v248
        %v265 = vpack.c.b16 %v251, %v250
        %v266 = vpack.c.b16 %v253, %v252
        %v267 = vpack.c.b16 %v255, %v254
        %v268 = vpack.c.b16 %v257, %v256
        %v269 = vpack.c.b16 %v259, %v258
        %v270 = vpack.c.b16 %v261, %v260
        %v271 = vpack.c.b16 %v263, %v262
        %280 = vmatprep.subr.bf16.mxu0 0
        %281 = vmatpush1.bf16.msra.mxu0 %v264
        %282 = vmatprep.subr.bf16.mxu0 0
        %283 = vmatpush1.bf16.msra.mxu0 %v265
        %284 = vmatprep.subr.bf16.mxu0 0
        %285 = vmatpush1.bf16.msra.mxu0 %v266
        %286 = vmatprep.subr.bf16.mxu0 0
        %287 = vmatpush1.bf16.msra.mxu0 %v267
        %288 = vmatprep.subr.bf16.mxu0 0
        %289 = vmatpush1.bf16.msra.mxu0 %v268
        %290 = vmatprep.subr.bf16.mxu0 0
        %291 = vmatpush1.bf16.msra.mxu0 %v269
        %292 = vmatprep.subr.bf16.mxu0 0
        %293 = vmatpush1.bf16.msra.mxu0 %v270
        %294 = vmatprep.subr.bf16.mxu0 0
        %295 = vmatpush1.bf16.msra.mxu0 %v271
        %296 = vmatprep.subr.bf16.mxu0 0
        %297 = vmatpush1.bf16.msra.mxu0 0
        %298 = vmatprep.subr.bf16.mxu0 0
        %299 = vmatpush1.bf16.msra.mxu0 0
        %300 = vmatprep.subr.bf16.mxu0 0
        %301 = vmatpush1.bf16.msra.mxu0 0
        %302 = vmatprep.subr.bf16.mxu0 0
        %303 = vmatpush1.bf16.msra.mxu0 0
        %304 = vmatprep.subr.bf16.mxu0 0
        %305 = vmatpush1.bf16.msra.mxu0 0
        %306 = vmatprep.subr.bf16.mxu0 0
        %307 = vmatpush1.bf16.msra.mxu0 0
        %308 = vmatprep.subr.bf16.mxu0 0
        %309 = vmatpush1.bf16.msra.mxu0 0
        %310 = vmatprep.subr.bf16.mxu0 0
        %311 = vmatpush1.bf16.msra.mxu0 0
        %312 = vmatprep.mubr.bf16.mxu0 0
        %313 = vmatmul.mubr.bf16.gmra.mrb[0].mxu0 %v228
        %v314 = vpop.f32.mrb[0].mxu0
        %v315 = vadd.f32 %v218, %v314
        %v316 = vpop.f32.mrb[0].mxu0
        %v317 = vpop.f32.mrb[0].mxu0
        %v318 = vadd.f32 %v218, %v317
        %v319 = vpop.f32.mrb[0].mxu0
        %320 = vmatprep.mubr.bf16.mxu0 0
        %321 = vmatmul.mubr.bf16.gmra.mrb[0].mxu0 %v229
        %v322 = vpop.f32.mrb[0].mxu0
        %v323 = vadd.f32 %v218, %v322
        %v324 = vpop.f32.mrb[0].mxu0
        %v325 = vpop.f32.mrb[0].mxu0
        %v326 = vadd.f32 %v218, %v325
        %v327 = vpop.f32.mrb[0].mxu0
        %328 = vdwg.mxu0
        %v329 = vpack.c.bf16 %v318, %v315
        %v330 = vpack.c.bf16 %v326, %v323
        %v333 = vunpack.c.l.b16 %v329
        %v334 = vunpack.c.h.b16 %v329
        %v335 = vunpack.c.l.b16 %v330
        %v336 = vunpack.c.h.b16 %v330
        %v337 = vpack.c.b16 %v333, %v333
        %v338 = vpack.c.b16 %v334, %v334
        %v339 = vpack.c.b16 %v335, %v335
        %v340 = vpack.c.b16 %v336, %v336
        %345 = vst [vmem:[%s172] sm:$0xf] %v337
        %346 = vst [vmem:[%s172 + $0x4] sm:$0xf] %v338
        %347 = vst [vmem:[%s172 + $0x8] sm:$0xf] %v339
        %348 = vst [vmem:[%s172 + $0xc] sm:$0xf] %v340
        %s349 = sand.u32 %s90, 1
        %s350 = sand.u32 %s90, 1
        %s351 = smul.addr %s350, 16
        %s352 = scalar_lea.vmem [#allocation2], %s351
        // Predicated region
        $region33: #{headwise_forward.1} parent=31 // pred_check
          %p353 = pneg %p100
        $region34: #{headwise_forward.1} parent=31 // pred_check_branch
          %355 = sbr.rel (%p353) target = $region36
        $region35: #{headwise_forward.1} parent=31 // pred_region
          %s356 = smul.u32 4, %s14
          %s357 = ssub.s32 6, %s356
          %p358 = scmp.lt.s32.totalorder %s357, 4
          %s359 = scalar_select %p358, %s357, 4
          %s360 = smul.u32 64, %s359
          %p361 = scmp.ne.s32.totalorder 0, %s360
          %s362 = smul.addr %s356, 4
          %s363 = scalar_lea.vmem %s3, %s362
          // Predicated region
          $region37: #{headwise_forward.1} parent=35 // pred_check
            %p364 = pneg %p361
          $region38: #{headwise_forward.1} parent=35 // pred_check_branch
            %366 = sbr.rel (%p364) target = $region40
          $region39: #{headwise_forward.1} parent=35 // pred_region
            // Predicated region
            $region41: #{headwise_forward.1} parent=39 // pred_check
              _
            $region42: #{headwise_forward.1} parent=39 // pred_check_branch
              %368 = sbr.rel target = $region44
            $region43: #{headwise_forward.1} parent=39 // pred_region
              // Predicated region
              $region63: #{headwise_forward.1} parent=43 // pred_check
                _
              $region64: #{headwise_forward.1} parent=43 // pred_check_branch
                %423 = sbr.rel (0) target = $region66
              $region65: #{headwise_forward.1} parent=43 // pred_region
                %s425 = sshrl.u32 %s359, 2
                // While loop
                $region67: #{headwise_forward.1} parent=65 // loop_pre_header
                  _
                $region68: #{headwise_forward.1} parent=65 // loop_header
                  %s427 = sphi 0, %s429
                  %p428 = scmp.ge.s32.totalorder %s427, %s425
                  %s432 = sphi 0, %s445
                  %s433 = sphi %s352, %s448
                  %s434 = sphi %s363, %s449
                $region69: #{headwise_forward.1} parent=65 // loop_header_branch
                  %431 = sbr.rel (%p428) target = $region73
                $region70: #{headwise_forward.1} parent=65 // loop_body
                  %v435 = vld [vmem:[%s433] sm:$0xf]
                  %436 = vst [vmem:[%s434] sm:$0xf] %v435
                  %v437 = vld [vmem:[%s433 + $0x4] sm:$0xf]
                  %438 = vst [vmem:[%s434 + $0x4] sm:$0xf] %v437
                  %v439 = vld [vmem:[%s433 + $0x8] sm:$0xf]
                  %440 = vst [vmem:[%s434 + $0x8] sm:$0xf] %v439
                  %v441 = vld [vmem:[%s433 + $0xc] sm:$0xf]
                  %442 = vst [vmem:[%s434 + $0xc] sm:$0xf] %v441
                  %s443 = sadd.s32 1, %s432
                  %p444 = scmp.ge.s32.totalorder %s443, %s425
                  %s445 = scalar_select %p444, 0, %s443
                  %s446 = smul.u32 %s445, 16
                  %s447 = smul.u32 %s445, 16
                  %s448 = scalar_lea.vmem %s352, %s446 [#allocation2]
                  %s449 = scalar_lea.vmem %s363, %s447
                $region71: #{headwise_forward.1} parent=65 // loop_footer
                  %s429 = sadd.s32 %s427, 1
                $region72: #{headwise_forward.1} parent=65 // loop_footer_branch
                  %426 = sbr.rel target = $region68
                $region73: #{headwise_forward.1} parent=65 // loop_exit
                  _
                %s450 = sshrl.u32 %s359, 2
                %s451 = sand.u32 %s359, 3
                %s452 = smul.u32 %s450, 4
                %s453 = smul.u32 4, %s452
                %s454 = scalar_lea.vmem %s352, %s453 [#allocation2]
                %s455 = smul.u32 4, %s452
                %s456 = scalar_lea.vmem %s363, %s455
                // While loop
                $region74: #{headwise_forward.1} parent=65 // loop_pre_header
                  _
                $region75: #{headwise_forward.1} parent=65 // loop_header
                  %s458 = sphi 0, %s460
                  %p459 = scmp.ge.s32.totalorder %s458, %s451
                  %s463 = sphi 0, %s470
                  %s464 = sphi %s454, %s473
                  %s465 = sphi %s456, %s474
                $region76: #{headwise_forward.1} parent=65 // loop_header_branch
                  %462 = sbr.rel (%p459) target = $region80
                $region77: #{headwise_forward.1} parent=65 // loop_body
                  %v466 = vld [vmem:[%s464] sm:$0xf]
                  %467 = vst [vmem:[%s465] sm:$0xf] %v466
                  %s468 = sadd.s32 1, %s463
                  %p469 = scmp.ge.s32.totalorder %s468, %s451
                  %s470 = scalar_select %p469, 0, %s468
                  %s471 = smul.u32 %s470, 4
                  %s472 = smul.u32 %s470, 4
                  %s473 = scalar_lea.vmem %s454, %s471 [#allocation2]
                  %s474 = scalar_lea.vmem %s456, %s472
                $region78: #{headwise_forward.1} parent=65 // loop_footer
                  %s460 = sadd.s32 %s458, 1
                $region79: #{headwise_forward.1} parent=65 // loop_footer_branch
                  %457 = sbr.rel target = $region75
                $region80: #{headwise_forward.1} parent=65 // loop_exit
                  _
              $region66: #{headwise_forward.1} parent=43 // pred_fallthru
                _
            $region44: #{headwise_forward.1} parent=39 // pred_fallthru
              _
            // Predicated region
            $region45: #{headwise_forward.1} parent=39 // pred_check
              _
            $region46: #{headwise_forward.1} parent=39 // pred_check_branch
              %370 = sbr.rel (0) target = $region48
            $region47: #{headwise_forward.1} parent=39 // pred_region
              %s372 = sshrl.u32 %s359, 2
              // While loop
              $region49: #{headwise_forward.1} parent=47 // loop_pre_header
                _
              $region50: #{headwise_forward.1} parent=47 // loop_header
                %s374 = sphi 0, %s376
                %p375 = scmp.ge.s32.totalorder %s374, %s372
                %s379 = sphi 0, %s392
                %s380 = sphi %s352, %s395
                %s381 = sphi %s363, %s396
              $region51: #{headwise_forward.1} parent=47 // loop_header_branch
                %378 = sbr.rel (%p375) target = $region55
              $region52: #{headwise_forward.1} parent=47 // loop_body
                %v382 = vld [vmem:[%s380] sm:$0xf]
                %383 = vst [vmem:[%s381] sm:$0xf] %v382
                %v384 = vld [vmem:[%s380 + $0x4] sm:$0xf]
                %385 = vst [vmem:[%s381 + $0x4] sm:$0xf] %v384
                %v386 = vld [vmem:[%s380 + $0x8] sm:$0xf]
                %387 = vst [vmem:[%s381 + $0x8] sm:$0xf] %v386
                %v388 = vld [vmem:[%s380 + $0xc] sm:$0xf]
                %389 = vst [vmem:[%s381 + $0xc] sm:$0xf] %v388
                %s390 = sadd.s32 1, %s379
                %p391 = scmp.ge.s32.totalorder %s390, %s372
                %s392 = scalar_select %p391, 0, %s390
                %s393 = smul.u32 %s392, 16
                %s394 = smul.u32 %s392, 16
                %s395 = scalar_lea.vmem %s352, %s393 [#allocation2]
                %s396 = scalar_lea.vmem %s363, %s394
              $region53: #{headwise_forward.1} parent=47 // loop_footer
                %s376 = sadd.s32 %s374, 1
              $region54: #{headwise_forward.1} parent=47 // loop_footer_branch
                %373 = sbr.rel target = $region50
              $region55: #{headwise_forward.1} parent=47 // loop_exit
                _
              %s397 = sshrl.u32 %s359, 2
              %s398 = sand.u32 %s359, 3
              %s399 = smul.u32 %s397, 4
              %s400 = smul.u32 4, %s399
              %s401 = scalar_lea.vmem %s352, %s400 [#allocation2]
              %s402 = smul.u32 4, %s399
              %s403 = scalar_lea.vmem %s363, %s402
              // While loop
              $region56: #{headwise_forward.1} parent=47 // loop_pre_header
                _
              $region57: #{headwise_forward.1} parent=47 // loop_header
                %s405 = sphi 0, %s407
                %p406 = scmp.ge.s32.totalorder %s405, %s398
                %s410 = sphi 0, %s417
                %s411 = sphi %s401, %s420
                %s412 = sphi %s403, %s421
              $region58: #{headwise_forward.1} parent=47 // loop_header_branch
                %409 = sbr.rel (%p406) target = $region62
              $region59: #{headwise_forward.1} parent=47 // loop_body
                %v413 = vld [vmem:[%s411] sm:$0xf]
                %414 = vst [vmem:[%s412] sm:$0xf] %v413
                %s415 = sadd.s32 1, %s410
                %p416 = scmp.ge.s32.totalorder %s415, %s398
                %s417 = scalar_select %p416, 0, %s415
                %s418 = smul.u32 %s417, 4
                %s419 = smul.u32 %s417, 4
                %s420 = scalar_lea.vmem %s401, %s418 [#allocation2]
                %s421 = scalar_lea.vmem %s403, %s419
              $region60: #{headwise_forward.1} parent=47 // loop_footer
                %s407 = sadd.s32 %s405, 1
              $region61: #{headwise_forward.1} parent=47 // loop_footer_branch
                %404 = sbr.rel target = $region57
              $region62: #{headwise_forward.1} parent=47 // loop_exit
                _
            $region48: #{headwise_forward.1} parent=39 // pred_fallthru
              _
          $region40: #{headwise_forward.1} parent=35 // pred_fallthru
            _
          %475 = vnop
        $region36: #{headwise_forward.1} parent=31 // pred_fallthru
          _
      $region32: #{headwise_forward.1} parent=5 // pred_fallthru
        _
      %p476 = scmp.le.s32.totalorder 2, %s9
      // Predicated region
      $region81: #{headwise_forward.1} parent=5 // pred_check
        %p477 = pneg %p476
      $region82: #{headwise_forward.1} parent=5 // pred_check_branch
        %479 = sbr.rel (%p477) target = $region84
      $region83: #{headwise_forward.1} parent=5 // pred_region
        %s480 = ssub.s32 %s9, 2
        // Predicated region
        $region85: #{headwise_forward.1} parent=83 // pred_check
          %p481 = pneg %p106
        $region86: #{headwise_forward.1} parent=83 // pred_check_branch
          %483 = sbr.rel (%p481) target = $region88
        $region87: #{headwise_forward.1} parent=83 // pred_region
          %s484 = sand.u32 %s91, 1
          %s485 = sand.u32 %s91, 1
          %s486 = smul.addr %s485, 16
          %s487 = scalar_lea.vmem [#allocation2], %s486
        $region88: #{headwise_forward.1} parent=83 // pred_fallthru
          _
      $region84: #{headwise_forward.1} parent=5 // pred_fallthru
        _
    $region6: #{headwise_forward.1} parent=1 // loop_footer
      %s13 = sadd.s32 1, %s9
    $region7: #{headwise_forward.1} parent=1 // loop_footer_branch
      %8 = sbr.rel target = $region3
    $region8: #{headwise_forward.1} parent=1 // loop_exit
      _

</llo_original>
